<compile_context>
chip_gen: v5e
topology: v5e:2x2
jax: 0.10.0
libtpu: 0.0.40
codegen_flags: <defaults>
</compile_context>

<pallas_src>
import jax
import jax.numpy as jnp
from jax.experimental import pallas as pl
from jax.experimental.pallas import tpu as pltpu

LANES = 128  # lane width


def _round_up(x, m):
    return ((x + m - 1) // m) * m


def _chip_defaults():
    """(num_tensorcores_per_chip, target_block_bytes) for the local TPU."""
    kind = ""
    try:
        kind = jax.devices()[0].device_kind.lower()
    except Exception:
        pass
    if ("v7" in kind) or ("tpu7" in kind) or ("7x" in kind):
        return 2, 8 << 20          # v7x: 2 TCs, 8 MiB blocks (2x8 << 32 MiB scoped)
    if "v6" in kind:
        return 1, 8 << 20          # v6e: 1 TC, 8 MiB blocks
    return 1, 4 << 20              # v5e / unknown: 1 TC, 4 MiB (16 MiB scoped VMEM)


def _make_kernel(sub, P, T, valid_rows_last, ragged):
    """Kernel with static shape/grid params baked in via closure."""

    def kernel(x_ref, o_ref, acc_ref):
        p = pl.program_id(0)
        t = pl.program_id(1)

        @pl.when(t == 0)
        def _init():
            acc_ref[...] = jnp.full(acc_ref.shape, jnp.inf, dtype=acc_ref.dtype)

        x = x_ref[...]  # (tile_rows, 128), native dtype (no f32 upcast)

        def _accumulate(xt):
            # Fold the block into one (sub, 128) native vreg tile via
            # elementwise (VPU) mins across tiles; no XLU, no scalar dep.
            part = jnp.min(xt.reshape(-1, sub, LANES), axis=0)
            acc_ref[...] = jnp.minimum(acc_ref[...], part)

        if ragged:
            # Only the very last global block is ragged; gate the mask so every
            # other step runs the plain (mask-free) path.
            is_last = jnp.logical_and(p == P - 1, t == T - 1)

            @pl.when(is_last)
            def _masked():
                rows = jax.lax.broadcasted_iota(jnp.int32, x.shape, 0)
                xm = jnp.where(rows < valid_rows_last, x,
                               jnp.array(jnp.inf, dtype=x.dtype))
                _accumulate(xm)

            @pl.when(jnp.logical_not(is_last))
            def _plain():
                _accumulate(x)
        else:
            _accumulate(x)

        @pl.when(t == pl.num_programs(1) - 1)
        def _finalize():
            # Single lane-dense unmasked store; no in-kernel cross-lane reduce.
            o_ref[...] = acc_ref[...]

    return kernel


def unary_min(a):
    """JAX wrapper reproducing torch.min(a + a) -> 0-d array (same dtype)."""
    orig_dtype = a.dtype
    assert jnp.issubdtype(orig_dtype, jnp.floating), "float dtypes only"
    # TODO(synk): integer inputs (a+a wraparound semantics) are not handled.

    x = a.reshape(-1)
    n = x.size
    assert n > 0, "torch.min of an empty tensor is undefined"

    itemsize = jnp.dtype(orig_dtype).itemsize
    sub = {4: 8, 2: 16, 1: 32}.get(itemsize, 8)  # native sublane packing

    # Split off any ragged <128-element lane tail; its min is folded back in on
    # the host for negligible cost (no full-array jnp.pad materialization).
    m = (n // LANES) * LANES
    tail_min = None
    if m != n:
        tail_min = jnp.min(x[m:])
        if m == 0:
            return (tail_min * 2).astype(orig_dtype)
        # TODO(synk): the prefix slice still copies the bulk once; a fully
        # copy-free ragged path needs a manual-DMA (memory_space=pl.ANY) kernel.
        x = x[:m]

    R = m // LANES
    x2d = x.reshape(R, LANES)

    num_tc, block_bytes = _chip_defaults()

    # Block sizing: ~block_bytes per grid step, multiple of the dtype's native
    # sublane packing, never (much) larger than the array itself.
    target_rows = max(sub, (block_bytes // (LANES * itemsize)) // sub * sub)
    tile_rows = min(target_rows, _round_up(R, sub))
    num_tiles = pl.cdiv(R, tile_rows)

    # Megacore split only on 2-TC chips (v7x), and only when the tile count
    # divides evenly -- no clamp-and-refetch of already-processed blocks.
    P = num_tc if num_tiles >= num_tc else 1
    if P > 1 and num_tiles % P != 0:
        alt_rows = _round_up(pl.cdiv(R, num_tiles + 1), sub)
        alt_tiles = pl.cdiv(R, alt_rows)
        if alt_tiles % P == 0:
            tile_rows, num_tiles = alt_rows, alt_tiles
        else:
            P = 1
    T = num_tiles // P
    assert P * T == num_tiles

    ragged = (R % tile_rows) != 0
    valid_rows_last = R - (num_tiles - 1) * tile_rows

    kernel = _make_kernel(sub, P, T, valid_rows_last, ragged)

    call_kwargs = dict(
        out_shape=jax.ShapeDtypeStruct((P * sub, LANES), orig_dtype),
        grid_spec=pltpu.PrefetchScalarGridSpec(
            num_scalar_prefetch=0,
            grid=(P, T),
            in_specs=[pl.BlockSpec((tile_rows, LANES),
                                   lambda p, t: (p * T + t, 0))],
            out_specs=pl.BlockSpec((sub, LANES), lambda p, t: (p, 0)),
            scratch_shapes=[pltpu.VMEM((sub, LANES), orig_dtype)],
        ),
        compiler_params=pltpu.CompilerParams(
            # Leading axis shards across TensorCores on megacore chips (v7x);
            # trailing axis is the sequential reduction sweep.
            dimension_semantics=("parallel", "arbitrary")),
    )
    try:
        fn = pl.pallas_call(
            kernel,
            cost_estimate=pl.CostEstimate(
                flops=int(m), transcendentals=0,
                bytes_accessed=int(m * itemsize + P * sub * LANES * itemsize)),
            **call_kwargs)
    except TypeError:  # older jax without cost_estimate kwarg
        fn = pl.pallas_call(kernel, **call_kwargs)

    out = fn(x2d)

    partial = jnp.min(out)
    if tail_min is not None:
        partial = jnp.minimum(partial, tail_min)
    # min(a + a) == 2 * min(a) exactly for IEEE floats (doubling is monotonic;
    # overflow to +/-inf matches torch's a+a); apply the x2 in the input dtype.
    return (partial * 2).astype(orig_dtype)


if __name__ == "__main__":
    key = jax.random.PRNGKey(0)
    # Small NCHW input consistent with the (shape-agnostic) module.
    a = jax.random.normal(key, (2, 4, 16, 16), dtype=jnp.float32)

    result = jax.block_until_ready(unary_min(a))

    # Correctness check against the pure-JAX reference of torch.min(a + a).
    ref = jnp.min(a + a)
    assert jnp.allclose(result, ref), (result, ref)

    print("KERNEL_OK")
</pallas_src>

<mosaic_0001>
module attributes {stable_mosaic.version = 11 : i64} {
  func.func @kernel(%arg0: i32, %arg1: i32, %arg2: memref<16x128xf32, #tpu.memory_space<vmem>>, %arg3: memref<8x128xf32, #tpu.memory_space<vmem>>, %arg4: memref<8x128xf32, #tpu.memory_space<vmem>>) attributes {dimension_semantics = [#tpu.dimension_semantics<parallel>, #tpu.dimension_semantics<arbitrary>], iteration_bounds = array<i64: 1, 1>, scalar_prefetch = 0 : i64, scratch_operands = 1 : i64, tpu.core_type = #tpu.core_type<tc>, window_params = [{transform_indices = @transform_0, window_bounds = array<i64: 16, 128>}, {transform_indices = @transform_1, window_bounds = array<i64: 8, 128>}]} {
    %c0_i32 = arith.constant 0 : i32
    %0 = arith.cmpi eq, %arg1, %c0_i32 : i32
    %1 = arith.extui %0 : i1 to i32
    %c0_i32_0 = arith.constant 0 : i32
    %2 = arith.cmpi ne, %1, %c0_i32_0 : i32
    scf.if %2 {
      %cst_8 = arith.constant 0x7F800000 : f32
      %12 = vector.broadcast %cst_8 : f32 to vector<8x128xf32>
      %c0_9 = arith.constant 0 : index
      %c0_10 = arith.constant 0 : index
      %13 = vector.load %arg4[%c0_9, %c0_10] : memref<8x128xf32, #tpu.memory_space<vmem>>, vector<8x128xf32>
      tpu.vector_store %arg4[%c0_9, %c0_10], %12 {strides = array<i32>} : memref<8x128xf32, #tpu.memory_space<vmem>>, vector<8x128xf32>,
    } else {
    }
    %c0 = arith.constant 0 : index
    %c0_1 = arith.constant 0 : index
    %3 = vector.load %arg2[%c0, %c0_1] : memref<16x128xf32, #tpu.memory_space<vmem>>, vector<16x128xf32>
    %4 = vector.shape_cast %3 : vector<16x128xf32> to vector<2x8x128xf32>
    %cst = arith.constant dense<0x7F800000> : vector<8x128xf32>
    %5 = vector.multi_reduction <minimumf>, %4, %cst [0] : vector<2x8x128xf32> to vector<8x128xf32>
    %c0_2 = arith.constant 0 : index
    %c0_3 = arith.constant 0 : index
    %6 = vector.load %arg4[%c0_2, %c0_3] : memref<8x128xf32, #tpu.memory_space<vmem>>, vector<8x128xf32>
    %7 = arith.minimumf %6, %5 : vector<8x128xf32>
    %c0_4 = arith.constant 0 : index
    %c0_5 = arith.constant 0 : index
    %8 = vector.load %arg4[%c0_4, %c0_5] : memref<8x128xf32, #tpu.memory_space<vmem>>, vector<8x128xf32>
    tpu.vector_store %arg4[%c0_4, %c0_5], %7 {strides = array<i32>} : memref<8x128xf32, #tpu.memory_space<vmem>>, vector<8x128xf32>,
    %c0_i32_6 = arith.constant 0 : i32
    %9 = arith.cmpi eq, %arg1, %c0_i32_6 : i32
    %10 = arith.extui %9 : i1 to i32
    %c0_i32_7 = arith.constant 0 : i32
    %11 = arith.cmpi ne, %10, %c0_i32_7 : i32
    scf.if %11 {
      %c0_8 = arith.constant 0 : index
      %c0_9 = arith.constant 0 : index
      %12 = vector.load %arg4[%c0_8, %c0_9] : memref<8x128xf32, #tpu.memory_space<vmem>>, vector<8x128xf32>
      %c0_10 = arith.constant 0 : index
      %c0_11 = arith.constant 0 : index
      %13 = vector.load %arg3[%c0_10, %c0_11] : memref<8x128xf32, #tpu.memory_space<vmem>>, vector<8x128xf32>
      tpu.vector_store %arg3[%c0_10, %c0_11], %12 {strides = array<i32>} : memref<8x128xf32, #tpu.memory_space<vmem>>, vector<8x128xf32>,
    } else {
    }
    return
  }
  func.func @transform_0(%arg0: i32, %arg1: i32) -> (i32, i32) {
    %c1_i32 = arith.constant 1 : i32
    %0 = arith.muli %arg0, %c1_i32 : i32
    %1 = arith.addi %0, %arg1 : i32
    %c0_i32 = arith.constant 0 : i32
    %c0_i32_0 = arith.constant 0 : i32
    return %1, %c0_i32 : i32, i32
  }
  func.func @transform_1(%arg0: i32, %arg1: i32) -> (i32, i32) {
    %c0_i32 = arith.constant 0 : i32
    %c0_i32_0 = arith.constant 0 : i32
    return %arg0, %c0_i32 : i32, i32
  }
}

</mosaic_0001>

<llo_original>
// kernel: tpu_custom_call.1
$region0: #{tpu_custom_call.1}
  #allocation0 [shape = 'u32[]', space=smem, size = 0x4, offset = 0x4, fixed_abs, tag = 'smem constant byte address 0x4 - core index']
  #allocation1 [shape = 'u32[72,128]{1,0:T(1,128)}', space=vmem, size = 0x9000, scoped, tag = 'internal scratch']
  #allocation2 [shape = 'f32[8,128]{1,0:T(8,128)}', space=vmem, size = 0x1000, scoped, tag = 'scratch operand']
  %s0 = inlined_call_operand.hbm [shape: f32[16,128], index: 0, kind: input, shape index: {}]
  %s1 = inlined_call_operand.hbm [shape: f32[8,128], index: 1, kind: output, shape index: {}]
  %s2 = sld [smem:[#allocation0]]
  $region26: #{tpu_custom_call.1} parent=0
    _
  %s4 = ssub.s32 1, %s2
  %s5 = scalar_select 0, %s4, %s2
  $region1: #{tpu_custom_call.1} parent=0
    #allocation3 [shape = 'u8[8192]{0}', space=vmem, size = 0x2000, scoped, tag = 'input window, operand 0, single buffered']
    #allocation4 [shape = 's32[1]{0}', space=sflag, size = 0x4, scoped, tag = 'scoped memory for tpu_custom_call.1']
    #allocation5 [shape = 's32[1]{0}', space=sflag, size = 0x4, scoped, tag = 'scoped memory for tpu_custom_call.1']
    #allocation6 [shape = 'u8[4096]{0}', space=vmem, size = 0x1000, scoped, tag = 'output window, operand 0, single buffered']
    %6 = vsyncpa [#allocation4], 0
    %7 = vsyncpa [#allocation5], 0
    // Predicated region
    $region2: #{tpu_custom_call.1} parent=1 // pred_check
      _
    $region3: #{tpu_custom_call.1} parent=1 // pred_check_branch
      %9 = sbr.rel (0) target = $region5
    $region4: #{tpu_custom_call.1} parent=1 // pred_region
      %s10 = sadd.s32 0, 0
      %s11 = smul.u32 2, %s10
      %13 = vsyncadd [#allocation4], 0
      %s14 = smul.addr %s11, 8
      %s15 = scalar_lea.hbm %s0, %s14
      %s16 = sshll.u32 %s15, 4
      %s17 = int_to_ptr.hbm [resolvable:$true] %s16
      %s18 = sshll.u32 [#allocation3], 4
      %s19 = int_to_ptr.vmem [resolvable:$true] %s18
      %24 = dma.hbm_to_vmem [thread:$0]  %s17, 256, %s19, [#allocation4], 128, 128, 8
    $region5: #{tpu_custom_call.1} parent=1 // pred_fallthru
      _
    // Predicated region
    $region6: #{tpu_custom_call.1} parent=1 // pred_check
      _
    $region7: #{tpu_custom_call.1} parent=1 // pred_check_branch
      %26 = sbr.rel (0) target = $region9
    $region8: #{tpu_custom_call.1} parent=1 // pred_region
      %28 = dma.done [#allocation4], 256
    $region9: #{tpu_custom_call.1} parent=1 // pred_fallthru
      _
    %s29 = sadd.s32 0, 0
    %s30 = smul.u32 2, %s29
    %p31 = scmp.eq.s32.totalorder 0, 0
    // Predicated region
    $region10: #{tpu_custom_call.1} parent=1 // pred_check
      %p32 = pneg %p31
    $region11: #{tpu_custom_call.1} parent=1 // pred_check_branch
      %34 = sbr.rel (%p32) target = $region13
    $region12: #{tpu_custom_call.1} parent=1 // pred_region
      %35 = vst [vmem:[#allocation2] sm:$0xff] inf
    $region13: #{tpu_custom_call.1} parent=1 // pred_fallthru
      _
    %v36 = vld [vmem:[#allocation3] sm:$0xff]
    %v37 = vld [vmem:[#allocation3 + $0x8] sm:$0xff]
    %v38 = vmin.f32 %v36, %v37
    %v39 = vld [vmem:[#allocation2] sm:$0xff]
    %v40 = vmin.f32 %v39, %v38
    %41 = vst [vmem:[#allocation2] sm:$0xff] %v40
    // Predicated region
    $region14: #{tpu_custom_call.1} parent=1 // pred_check
      %p42 = pneg %p31
    $region15: #{tpu_custom_call.1} parent=1 // pred_check_branch
      %44 = sbr.rel (%p42) target = $region17
    $region16: #{tpu_custom_call.1} parent=1 // pred_region
      %v45 = vld [vmem:[#allocation2] sm:$0xff]
      %46 = vst [vmem:[#allocation6] sm:$0xff] %v45
    $region17: #{tpu_custom_call.1} parent=1 // pred_fallthru
      _
    // Predicated region
    $region18: #{tpu_custom_call.1} parent=1 // pred_check
      _
    $region19: #{tpu_custom_call.1} parent=1 // pred_check_branch
      %48 = sbr.rel (0) target = $region21
    $region20: #{tpu_custom_call.1} parent=1 // pred_region
      %50 = vsyncadd [#allocation5], 0
      %s52 = sshll.u32 [#allocation6], 4
      %s53 = int_to_ptr.vmem [resolvable:$true] %s52
      %s54 = sshll.u32 %s1, 4
      %s55 = int_to_ptr.hbm [resolvable:$true] %s54
      %57 = dma.vmem_to_hbm [thread:$0]  %s53, 128, %s55, [#allocation5]
    $region21: #{tpu_custom_call.1} parent=1 // pred_fallthru
      _
    // Predicated region
    $region22: #{tpu_custom_call.1} parent=1 // pred_check
      _
    $region23: #{tpu_custom_call.1} parent=1 // pred_check_branch
      %59 = sbr.rel (0) target = $region25
    $region24: #{tpu_custom_call.1} parent=1 // pred_region
      %61 = dma.done [#allocation5], 128
    $region25: #{tpu_custom_call.1} parent=1 // pred_fallthru
      _
    %62 = vsyncpa [#allocation4], 1
    %63 = vsyncpa [#allocation5], 1

</llo_original>
